<compile_context>
chip_gen: v7x
topology: tpu7x:2x2x1
jax: 0.10.0
libtpu: 0.0.40
codegen_flags: <defaults>
</compile_context>

<pallas_src>
import functools
import math

import jax
import jax.numpy as jnp
from jax.experimental import pallas as pl
from jax.experimental.pallas import tpu as pltpu


def _pick_tile(dim, cap, align):
    """Largest multiple of `align` that divides `dim` and is <= cap.

    Falls back to the full dim (always a legal Pallas block extent) when
    dim <= cap or no aligned divisor exists. Guarantees every chosen tile is
    either a multiple of `align` or equal to the full array dim, so blocks
    satisfy the TPU (8, 128) layout rule.
    """
    if dim <= cap:
        return dim
    t = (cap // align) * align
    while t >= align:
        if dim % t == 0:
            return t
        t -= align
    return dim


# ---------------------------------------------------------------------------
# 1) tiled matmul + bias (Q / K / V projections), full-K contraction per tile
# ---------------------------------------------------------------------------
def _matmul_bias_kernel(x_ref, w_ref, b_ref, o_ref):
    o_ref[...] = (
        jnp.dot(x_ref[...], w_ref[...], preferred_element_type=jnp.float32)
        + b_ref[...]
    ).astype(o_ref.dtype)


def matmul_bias(x, w, b, *, tm_cap=256, tn_cap=512):
    M, K = x.shape
    K2, N = w.shape
    assert K == K2 and b.shape == (N,)
    tm = _pick_tile(M, tm_cap, 8)      # sublane-aligned (or full M)
    tn = _pick_tile(N, tn_cap, 128)    # lane-aligned (or full N)
    grid = (M // tm, N // tn)

    return pl.pallas_call(
        _matmul_bias_kernel,
        out_shape=jax.ShapeDtypeStruct((M, N), x.dtype),
        grid_spec=pltpu.PrefetchScalarGridSpec(
            num_scalar_prefetch=0,
            grid=grid,
            in_specs=[
                pl.BlockSpec((tm, K), lambda i, j: (i, 0)),   # x tile, full K
                pl.BlockSpec((K, tn), lambda i, j: (0, j)),   # w tile, full K
                pl.BlockSpec((1, tn), lambda i, j: (0, j)),   # bias
            ],
            out_specs=pl.BlockSpec((tm, tn), lambda i, j: (i, j)),
        ),
        compiler_params=pltpu.CompilerParams(
            dimension_semantics=("parallel", "parallel"),
        ),
    )(x, w, b.reshape(1, N))


# ---------------------------------------------------------------------------
# 2) multi-head attention: K/V resident per batch, all heads per grid step
# ---------------------------------------------------------------------------
def _mha_kernel(q_ref, k_ref, v_ref, mask_ref, o_ref, *, num_heads, scale):
    D = q_ref.shape[-1]
    dh = D // num_heads

    # Fold the softmax scale into Q once (tq*D muls instead of H*tq*T).
    q = q_ref[0] * scale          # (tq, D), kept in native dtype for the MXU
    k = k_ref[0]                  # (T, D)  resident across all query tiles
    v = v_ref[0]                  # (T, D)
    mask = mask_ref[0]            # (1, T) additive key mask, f32

    for h in range(num_heads):    # static unroll; H is small for BERT configs
        lo = h * dh
        qh = q[:, lo:lo + dh]     # (tq, dh)
        kh = k[:, lo:lo + dh]     # (T, dh)
        vh = v[:, lo:lo + dh]     # (T, dh)

        # scores (tq, T) accumulated in f32 on the MXU (no operand up-cast)
        s = jax.lax.dot_general(
            qh, kh, (((1,), (1,)), ((), ())),
            preferred_element_type=jnp.float32)
        s = s + mask

        m = jnp.max(s, axis=-1, keepdims=True)
        p = jnp.exp(s - m)
        l = jnp.sum(p, axis=-1, keepdims=True)

        ctx = jnp.dot(p.astype(vh.dtype), vh,
                      preferred_element_type=jnp.float32)      # (tq, dh)
        ctx = ctx * pl.reciprocal(l, approx=True)              # EUP divide
        # Lane slab write into the lane-dense (tq, D) output block.
        o_ref[0, :, lo:lo + dh] = ctx.astype(o_ref.dtype)


def mha_attention(q, k, v, mask, *, num_heads, scale, tq_cap=256):
    """q, k, v: (B, T, D); mask: (B, 1, T) additive f32. Returns (B, T, D)."""
    B, T, D = q.shape
    tq = _pick_tile(T, tq_cap, 8)
    grid = (B, T // tq)

    kernel = functools.partial(_mha_kernel, num_heads=num_heads, scale=scale)
    return pl.pallas_call(
        kernel,
        out_shape=jax.ShapeDtypeStruct((B, T, D), q.dtype),
        grid_spec=pltpu.PrefetchScalarGridSpec(
            num_scalar_prefetch=0,
            grid=grid,
            in_specs=[
                pl.BlockSpec((1, tq, D), lambda b, qi: (b, qi, 0)),  # Q tile
                pl.BlockSpec((1, T, D), lambda b, qi: (b, 0, 0)),    # K resident
                pl.BlockSpec((1, T, D), lambda b, qi: (b, 0, 0)),    # V resident
                pl.BlockSpec((1, 1, T), lambda b, qi: (b, 0, 0)),    # key mask
            ],
            out_specs=pl.BlockSpec((1, tq, D), lambda b, qi: (b, qi, 0)),
        ),
        compiler_params=pltpu.CompilerParams(
            dimension_semantics=("parallel", "parallel"),
        ),
    )(q, k, v, mask)


# ---------------------------------------------------------------------------
# 3) full forward (mirrors BertSelfAttention.forward, eval mode)
# ---------------------------------------------------------------------------
def bert_self_attention(hidden_states, attention_mask, params, num_heads):
    B, T, D = hidden_states.shape
    dh = D // num_heads
    x = hidden_states.reshape(B * T, D)

    # Linear weights stored as (D_in, D_out): y = x @ W + b
    # (equivalent to torch's x @ weight.T + bias with weight = W.T).
    q = matmul_bias(x, params["wq"], params["bq"]).reshape(B, T, D)
    k = matmul_bias(x, params["wk"], params["bk"]).reshape(B, T, D)
    v = matmul_bias(x, params["wv"], params["bv"]).reshape(B, T, D)

    # BERT-style additive key-padding mask, broadcastable (B, 1, 1, T).
    mask = jnp.broadcast_to(attention_mask, (B, 1, 1, T)).reshape(B, 1, T)
    mask = mask.astype(jnp.float32)

    # Output comes back directly in (B, T, H*dh) order — no merge transpose.
    return mha_attention(q, k, v, mask, num_heads=num_heads,
                         scale=1.0 / math.sqrt(dh))


# ---------------------------------------------------------------------------
# pure-JAX reference for verification
# ---------------------------------------------------------------------------
def _reference(hidden_states, attention_mask, params, num_heads):
    B, T, D = hidden_states.shape
    H = num_heads
    dh = D // H
    q = hidden_states @ params["wq"] + params["bq"]
    k = hidden_states @ params["wk"] + params["bk"]
    v = hidden_states @ params["wv"] + params["bv"]

    def sh(x):
        return x.reshape(B, T, H, dh).transpose(0, 2, 1, 3)

    q, k, v = sh(q), sh(k), sh(v)
    s = jnp.einsum('bhqd,bhkd->bhqk', q, k) / math.sqrt(dh)
    s = s + attention_mask
    p = jax.nn.softmax(s, axis=-1)
    ctx = jnp.einsum('bhqk,bhkd->bhqd', p, v)
    return ctx.transpose(0, 2, 1, 3).reshape(B, T, D)


if __name__ == "__main__":
    key = jax.random.PRNGKey(0)
    ks = jax.random.split(key, 8)

    B, T, D, H = 2, 8, 32, 4
    hidden_states = jax.random.normal(ks[0], (B, T, D), dtype=jnp.float32)
    # BERT-style additive mask: 0 for keep, -10000 for masked positions.
    keep = (jax.random.uniform(ks[1], (B, 1, 1, T)) > 0.25).astype(jnp.float32)
    attention_mask = (1.0 - keep) * -10000.0

    scale = 0.02
    params = {
        "wq": scale * jax.random.normal(ks[2], (D, D), dtype=jnp.float32),
        "wk": scale * jax.random.normal(ks[3], (D, D), dtype=jnp.float32),
        "wv": scale * jax.random.normal(ks[4], (D, D), dtype=jnp.float32),
        "bq": scale * jax.random.normal(ks[5], (D,), dtype=jnp.float32),
        "bk": scale * jax.random.normal(ks[6], (D,), dtype=jnp.float32),
        "bv": scale * jax.random.normal(ks[7], (D,), dtype=jnp.float32),
    }

    out = bert_self_attention(hidden_states, attention_mask, params, num_heads=H)
    out = jax.block_until_ready(out)

    ref = _reference(hidden_states, attention_mask, params, num_heads=H)
    assert out.shape == (B, T, D)
    max_err = float(jnp.max(jnp.abs(out - ref)))
    # tolerance accounts for the EUP approximate reciprocal in the finalize
    assert jnp.allclose(out, ref, rtol=2e-3, atol=2e-3), max_err

    print("KERNEL_OK")
</pallas_src>

<mosaic_0001>
module attributes {stable_mosaic.version = 11 : i64} {
  func.func @_matmul_bias_kernel(%arg0: i32, %arg1: i32, %arg2: memref<16x32xf32, #tpu.memory_space<vmem>>, %arg3: memref<32x32xf32, #tpu.memory_space<vmem>>, %arg4: memref<1x32xf32, #tpu.memory_space<vmem>>, %arg5: memref<16x32xf32, #tpu.memory_space<vmem>>) attributes {dimension_semantics = [#tpu.dimension_semantics<parallel>, #tpu.dimension_semantics<parallel>], iteration_bounds = array<i64: 1, 1>, scalar_prefetch = 0 : i64, scratch_operands = 0 : i64, tpu.core_type = #tpu.core_type<tc>, window_params = [{transform_indices = @transform_0, window_bounds = array<i64: 16, 32>}, {transform_indices = @transform_1, window_bounds = array<i64: 32, 32>}, {transform_indices = @transform_2, window_bounds = array<i64: 1, 32>}, {transform_indices = @transform_3, window_bounds = array<i64: 16, 32>}]} {
    %c0 = arith.constant 0 : index
    %c0_0 = arith.constant 0 : index
    %0 = vector.load %arg2[%c0, %c0_0] : memref<16x32xf32, #tpu.memory_space<vmem>>, vector<16x32xf32>
    %c0_1 = arith.constant 0 : index
    %c0_2 = arith.constant 0 : index
    %1 = vector.load %arg3[%c0_1, %c0_2] : memref<32x32xf32, #tpu.memory_space<vmem>>, vector<32x32xf32>
    %cst = arith.constant dense<0.000000e+00> : vector<16x32xf32>
    %2 = tpu.matmul %0, %1, %cst {dimension_numbers = #tpu.dot_dimension_numbers<[1], [0], [0], [1], [0, 0, 1, 1], [], []>} : vector<16x32xf32>, vector<32x32xf32>, vector<16x32xf32> -> vector<16x32xf32>
    %c0_3 = arith.constant 0 : index
    %c0_4 = arith.constant 0 : index
    %3 = vector.load %arg4[%c0_3, %c0_4] : memref<1x32xf32, #tpu.memory_space<vmem>>, vector<1x32xf32>
    %4 = vector.broadcast %3 : vector<1x32xf32> to vector<16x32xf32>
    %5 = arith.addf %2, %4 : vector<16x32xf32>
    %c0_5 = arith.constant 0 : index
    %c0_6 = arith.constant 0 : index
    %6 = vector.load %arg5[%c0_5, %c0_6] : memref<16x32xf32, #tpu.memory_space<vmem>>, vector<16x32xf32>
    tpu.vector_store %arg5[%c0_5, %c0_6], %5 {strides = array<i32>} : memref<16x32xf32, #tpu.memory_space<vmem>>, vector<16x32xf32>,
    return
  }
  func.func @transform_0(%arg0: i32, %arg1: i32) -> (i32, i32) {
    %c0_i32 = arith.constant 0 : i32
    %c0_i32_0 = arith.constant 0 : i32
    return %arg0, %c0_i32 : i32, i32
  }
  func.func @transform_1(%arg0: i32, %arg1: i32) -> (i32, i32) {
    %c0_i32 = arith.constant 0 : i32
    %c0_i32_0 = arith.constant 0 : i32
    return %c0_i32, %arg1 : i32, i32
  }
  func.func @transform_2(%arg0: i32, %arg1: i32) -> (i32, i32) {
    %c0_i32 = arith.constant 0 : i32
    %c0_i32_0 = arith.constant 0 : i32
    return %c0_i32, %arg1 : i32, i32
  }
  func.func @transform_3(%arg0: i32, %arg1: i32) -> (i32, i32) {
    %c0_i32 = arith.constant 0 : i32
    return %arg0, %arg1 : i32, i32
  }
}

</mosaic_0001>

<llo_original>
// kernel: tpu_custom_call.1
$region0: #{tpu_custom_call.1}
  #allocation0 [shape = 'u32[]', space=smem, size = 0x4, offset = 0x4, fixed_abs, tag = 'smem constant byte address 0x4 - core index']
  #allocation1 [shape = 'u32[144,128]{1,0:T(1,128)}', space=vmem, size = 0x12000, scoped, tag = 'internal scratch']
  %s0 = inlined_call_operand.hbm [shape: f32[16,32], index: 0, kind: input, shape index: {}]
  %s1 = inlined_call_operand.hbm [shape: f32[32,32], index: 1, kind: input, shape index: {}]
  %s2 = inlined_call_operand.vmem [shape: f32[1,32], index: 2, kind: input, shape index: {}]
  %s3 = inlined_call_operand.hbm [shape: f32[16,32], index: 3, kind: output, shape index: {}]
  %s4 = sld [smem:[#allocation0]]
  $region30: #{tpu_custom_call.1} parent=0
    _
  %s6 = ssub.s32 1, %s4
  %s7 = scalar_select 0, %s6, %s4
  $region1: #{tpu_custom_call.1} parent=0
    #allocation2 [shape = 'u8[8192]{0}', space=vmem, size = 0x2000, scoped, tag = 'input window, operand 0, single buffered']
    #allocation3 [shape = 's32[1]{0}', space=sflag, size = 0x4, scoped, tag = 'scoped memory for tpu_custom_call.1']
    #allocation4 [shape = 's32[1]{0}', space=sflag, size = 0x4, scoped, tag = 'scoped memory for tpu_custom_call.1']
    #allocation5 [shape = 'u8[16384]{0}', space=vmem, size = 0x4000, scoped, tag = 'input window, operand 1, single buffered']
    #allocation6 [shape = 's32[1]{0}', space=sflag, size = 0x4, scoped, tag = 'scoped memory for tpu_custom_call.1']
    #allocation7 [shape = 'u8[8192]{0}', space=vmem, size = 0x2000, scoped, tag = 'output window, operand 0, single buffered']
    %8 = vsyncpa [#allocation3], 0
    %9 = vsyncpa [#allocation6], 0
    %10 = vsyncpa [#allocation4], 0
    // Predicated region
    $region2: #{tpu_custom_call.1} parent=1 // pred_check
      _
    $region3: #{tpu_custom_call.1} parent=1 // pred_check_branch
      %12 = sbr.rel (0) target = $region5
    $region4: #{tpu_custom_call.1} parent=1 // pred_region
      %s14 = ssub.s32 256, 256
      %15 = vsyncadd [#allocation3], %s14
      %s16 = sshll.u32 [#allocation2], 4
      %s17 = int_to_ptr.vmem [resolvable:$true] %s16
      %22 = dma.hbm_to_vmem [thread:$0]  %s0, 256, %s17, [#allocation3], 128, 128, 8
    $region5: #{tpu_custom_call.1} parent=1 // pred_fallthru
      _
    // Predicated region
    $region6: #{tpu_custom_call.1} parent=1 // pred_check
      _
    $region7: #{tpu_custom_call.1} parent=1 // pred_check_branch
      %24 = sbr.rel (0) target = $region9
    $region8: #{tpu_custom_call.1} parent=1 // pred_region
      %s26 = ssub.s32 512, 512
      %27 = vsyncadd [#allocation6], %s26
      %s28 = sshll.u32 [#allocation5], 4
      %s29 = int_to_ptr.vmem [resolvable:$true] %s28
      %34 = dma.hbm_to_vmem [thread:$0]  %s1, 512, %s29, [#allocation6], 128, 128, 8
    $region9: #{tpu_custom_call.1} parent=1 // pred_fallthru
      _
    // Predicated region
    $region10: #{tpu_custom_call.1} parent=1 // pred_check
      _
    $region11: #{tpu_custom_call.1} parent=1 // pred_check_branch
      %36 = sbr.rel (0) target = $region13
    $region12: #{tpu_custom_call.1} parent=1 // pred_region
      _
    $region13: #{tpu_custom_call.1} parent=1 // pred_fallthru
      _
    // Predicated region
    $region14: #{tpu_custom_call.1} parent=1 // pred_check
      _
    $region15: #{tpu_custom_call.1} parent=1 // pred_check_branch
      %38 = sbr.rel (0) target = $region17
    $region16: #{tpu_custom_call.1} parent=1 // pred_region
      %39 = dma.done [#allocation3], 256
    $region17: #{tpu_custom_call.1} parent=1 // pred_fallthru
      _
    // Predicated region
    $region18: #{tpu_custom_call.1} parent=1 // pred_check
      _
    $region19: #{tpu_custom_call.1} parent=1 // pred_check_branch
      %41 = sbr.rel (0) target = $region21
    $region20: #{tpu_custom_call.1} parent=1 // pred_region
      %42 = dma.done [#allocation6], 512
    $region21: #{tpu_custom_call.1} parent=1 // pred_fallthru
      _
    %v43 = vld [vmem:[#allocation2] sm:$0xff]
    %v44 = vld [vmem:[#allocation2 + $0x8] sm:$0xff]
    %v45 = vld [vmem:[#allocation5] sm:$0xff]
    %v46 = vld [vmem:[#allocation5 + $0x8] sm:$0xff]
    %v47 = vld [vmem:[#allocation5 + $0x10] sm:$0xff]
    %v48 = vld [vmem:[#allocation5 + $0x18] sm:$0xff]
    %v49 = vld [vmem:[%s2] sm:$0x1]
    %v51 = vlaneseq
    %v52 = vshrl.u32 %v51, 7
    %v53 = vsub.s32 0, %v52
    %v54 = vrot.slane %v49, %v53
    %vm56 = vcmask 261120
    %v58 = vsel %vm56, %v43, 0
    %v61 = vsel %vm56, %v44, 0
    %63 = vmatprep.subr.mxu0 0.0
    %64 = vmatpush1.msra.mxu0 %v45
    %65 = vmatprep.subr.mxu0 0.0
    %66 = vmatpush1.msra.mxu0 %v46
    %67 = vmatprep.subr.mxu0 0.0
    %68 = vmatpush1.msra.mxu0 %v47
    %69 = vmatprep.subr.mxu0 0.0
    %70 = vmatpush1.msra.mxu0 %v48
    %71 = vmatprep.subr.mxu0 0.0
    %72 = vmatpush1.msra.mxu0 0.0
    %73 = vmatprep.subr.mxu0 0.0
    %74 = vmatpush1.msra.mxu0 0.0
    %75 = vmatprep.subr.mxu0 0.0
    %76 = vmatpush1.msra.mxu0 0.0
    %77 = vmatprep.subr.mxu0 0.0
    %78 = vmatpush1.msra.mxu0 0.0
    %79 = vmatprep.subr.mxu0 0.0
    %80 = vmatpush1.msra.mxu0 0.0
    %81 = vmatprep.subr.mxu0 0.0
    %82 = vmatpush1.msra.mxu0 0.0
    %83 = vmatprep.subr.mxu0 0.0
    %84 = vmatpush1.msra.mxu0 0.0
    %85 = vmatprep.subr.mxu0 0.0
    %86 = vmatpush1.msra.mxu0 0.0
    %87 = vmatprep.subr.mxu0 0.0
    %88 = vmatpush1.msra.mxu0 0.0
    %89 = vmatprep.subr.mxu0 0.0
    %90 = vmatpush1.msra.mxu0 0.0
    %91 = vmatprep.subr.mxu0 0.0
    %92 = vmatpush1.msra.mxu0 0.0
    %93 = vmatprep.subr.mxu0 0.0
    %94 = vmatpush1.msra.mxu0 0.0
    %95 = vmatprep.subr.mxu0 0.0
    %96 = vmatpush1.msra.mxu0 0.0
    %97 = vmatprep.subr.mxu0 0.0
    %98 = vmatpush1.msra.mxu0 0.0
    %99 = vmatprep.subr.mxu0 0.0
    %100 = vmatpush1.msra.mxu0 0.0
    %101 = vmatprep.subr.mxu0 0.0
    %102 = vmatpush1.msra.mxu0 0.0
    %103 = vmatprep.subr.mxu0 0.0
    %104 = vmatpush1.msra.mxu0 0.0
    %105 = vmatprep.subr.mxu0 0.0
    %106 = vmatpush1.msra.mxu0 0.0
    %107 = vmatprep.subr.mxu0 0.0
    %108 = vmatpush1.msra.mxu0 0.0
    %109 = vmatprep.subr.mxu0 0.0
    %110 = vmatpush1.msra.mxu0 0.0
    %111 = vmatprep.subr.mxu0 0.0
    %112 = vmatpush1.msra.mxu0 0.0
    %113 = vmatprep.subr.mxu0 0.0
    %114 = vmatpush1.msra.mxu0 0.0
    %115 = vmatprep.subr.mxu0 0.0
    %116 = vmatpush1.msra.mxu0 0.0
    %117 = vmatprep.subr.mxu0 0.0
    %118 = vmatpush1.msra.mxu0 0.0
    %119 = vmatprep.subr.mxu0 0.0
    %120 = vmatpush1.msra.mxu0 0.0
    %121 = vmatprep.subr.mxu0 0.0
    %122 = vmatpush1.msra.mxu0 0.0
    %123 = vmatprep.subr.mxu0 0.0
    %124 = vmatpush1.msra.mxu0 0.0
    %125 = vmatprep.subr.mxu0 0.0
    %126 = vmatpush1.msra.mxu0 0.0
    %127 = vmatprep.mubr.f32.mxu0 0.0
    %128 = vmatmul.mubr.f32.gmra.mrb[0].mxu0 %v58
    %v129 = vpop.f32.mrb[0].mxu0
    %v130 = vadd.f32 %v54, %v129
    %v131 = vpop.f32.mrb[0].mxu0
    %132 = vmatprep.mubr.f32.mxu0 0.0
    %133 = vmatmul.mubr.f32.gmra.mrb[0].mxu0 %v61
    %v134 = vpop.f32.mrb[0].mxu0
    %v135 = vadd.f32 %v54, %v134
    %v136 = vpop.f32.mrb[0].mxu0
    %137 = vdwg.mxu0
    %138 = vst.msk [vmem:[#allocation7] sm:$0xff] %vm56, %v130
    %139 = vst.msk [vmem:[#allocation7 + $0x8] sm:$0xff] %vm56, %v135
    // Predicated region
    $region22: #{tpu_custom_call.1} parent=1 // pred_check
      _
    $region23: #{tpu_custom_call.1} parent=1 // pred_check_branch
      %141 = sbr.rel (0) target = $region25
    $region24: #{tpu_custom_call.1} parent=1 // pred_region
      %s143 = ssub.s32 256, 256
      %144 = vsyncadd [#allocation4], %s143
      %s145 = sshll.u32 [#allocation7], 4
      %s146 = int_to_ptr.vmem [resolvable:$true] %s145
      %151 = dma.vmem_to_hbm [thread:$0]  %s146, 256, %s3, [#allocation4], 128, 128, 8
    $region25: #{tpu_custom_call.1} parent=1 // pred_fallthru
      _
    // Predicated region
    $region26: #{tpu_custom_call.1} parent=1 // pred_check
      _
    $region27: #{tpu_custom_call.1} parent=1 // pred_check_branch
      %153 = sbr.rel (0) target = $region29
    $region28: #{tpu_custom_call.1} parent=1 // pred_region
      %154 = dma.done [#allocation4], 256
    $region29: #{tpu_custom_call.1} parent=1 // pred_fallthru
      _
    %155 = vsyncpa [#allocation3], 1
    %156 = vsyncpa [#allocation6], 1
    %157 = vsyncpa [#allocation4], 1

</llo_original>
